<compile_context>
chip_gen: v6e
topology: v6e:2x2x1
jax: 0.10.0
libtpu: 0.0.40
codegen_flags: <defaults>
</compile_context>

<pallas_src>
import functools

import jax
import jax.numpy as jnp
from jax import lax
from jax.experimental import pallas as pl
from jax.experimental.pallas import tpu as pltpu

LANES = 128
_MiB = 1024 * 1024


def _round_up(v, m):
    return ((v + m - 1) // m) * m


def _is_dual_core_chip():
    """True on chips with two TensorCores per device (v7x-class)."""
    try:
        return "v7" in jax.devices()[0].device_kind.lower()
    except Exception:
        return False


def _masked_mse_kernel(x_ref, t_ref, sum_ref, cnt_ref, *, ignored_index,
                       tile_rows, tiles_per_split, n_tiles, valid_rows,
                       mxu_row_reduce):
    """Accumulate per-lane sums of masked squared diffs and valid counts."""
    # Zero this split's accumulators on its first inner step.
    @pl.when(pl.program_id(1) == 0)
    def _init():
        sum_ref[...] = jnp.zeros_like(sum_ref)
        cnt_ref[...] = jnp.zeros_like(cnt_ref)

    tile_idx = pl.program_id(0) * tiles_per_split + pl.program_id(1)

    def accumulate(mask_rows):
        # Cast to f32 in-kernel (VPU filler); HBM traffic stays native dtype.
        x = x_ref[...].astype(jnp.float32)            # (tile_rows, 128)
        t = t_ref[...].astype(jnp.float32)            # (tile_rows, 128)
        valid = t != jnp.float32(ignored_index)
        if mask_rows:
            # Rows past `valid_rows` are DMA garbage (partial edge block, or a
            # clamped dead remainder tile) -> drop them from sum AND count.
            row_ids = tile_idx * tile_rows + lax.broadcasted_iota(
                jnp.int32, (tile_rows, LANES), 0)
            valid = jnp.logical_and(valid, row_ids < valid_rows)
        diff = jnp.where(valid, x - t, jnp.float32(0.0))
        sq = diff * diff
        vf = valid.astype(jnp.float32)
        if mxu_row_reduce:
            # v7x: the kernel can go VALU-bound with bf16 inputs; push the
            # sublane reduction onto the (otherwise idle) MXU.
            ones = jnp.ones((1, tile_rows), jnp.float32)
            sq_p = jnp.dot(ones, sq, preferred_element_type=jnp.float32)
            ct_p = jnp.dot(ones, vf, preferred_element_type=jnp.float32)
        else:
            sq_p = jnp.sum(sq, axis=0, keepdims=True)          # (1, 128)
            ct_p = jnp.sum(vf, axis=0, keepdims=True)          # (1, 128)
        sum_ref[...] += sq_p[None]                              # (1, 1, 128)
        cnt_ref[...] += ct_p[None]

    # Interior tiles need no positional masking; only the edge / dead tiles do.
    @pl.when(tile_idx < n_tiles - 1)
    def _interior():
        accumulate(False)

    @pl.when(tile_idx >= n_tiles - 1)
    def _edge():
        accumulate(True)


def custom_mse_loss(inp, target, ignored_index, *, tile_rows=2048,
                    num_splits=None):
    """Pallas implementation of CustomMSELoss.forward(input, target)."""
    x = jnp.ravel(inp)
    t = jnp.ravel(target)
    if x.size != t.size:
        raise ValueError("input and target must contain the same number of elements")
    total = x.size
    if total == 0:
        return jnp.float32(jnp.nan)   # mean over an empty selection

    is_dual_core = _is_dual_core_chip()

    # dtype-aware sublane multiple: 8 for f32, 16 for bf16, 32 for int8/fp8.
    min_item = min(x.dtype.itemsize, t.dtype.itemsize)
    sub = 8 * max(1, 4 // min_item)

    # --- lane-dense (rows, 128) presentation, with at most one row of pad ---
    rows = pl.cdiv(total, LANES)
    pad = rows * LANES - total          # 0..127 elements
    if pad:
        # Pad value for target MUST be ignored_index so the tail drops out of
        # both the squared-sum and the count.  (XLA has no buffer views, so a
        # pad is a whole-array copy; when total % 128 == 0 this branch is
        # skipped and the kernel streams the original buffer via a free
        # bitcast reshape.)
        x = jnp.pad(x, (0, pad))
        t = jnp.pad(t, (0, pad), constant_values=ignored_index)
    x2 = x.reshape(rows, LANES)
    t2 = t.reshape(rows, LANES)

    # --- tile sizing: ~1 MiB f32 blocks by default, hard-capped at 2 MiB ----
    max_item = max(x2.dtype.itemsize, t2.dtype.itemsize)
    cap_rows = max(sub, ((2 * _MiB) // (LANES * max_item)) // sub * sub)
    tile_rows = max(sub, min(_round_up(tile_rows, sub),
                             _round_up(rows, sub), cap_rows))
    n_tiles = pl.cdiv(rows, tile_rows)

    # --- split rows across TensorCores only where there are 2 of them -------
    if num_splits is None:
        num_splits = 2 if is_dual_core else 1
    num_splits = max(1, min(int(num_splits), n_tiles))
    tiles_per_split = pl.cdiv(n_tiles, num_splits)

    def in_index(c, i):
        g = c * tiles_per_split + i
        # Clamp dead remainder tiles onto the last real tile; the kernel masks
        # their contribution to zero via the row mask.
        return (jnp.minimum(g, n_tiles - 1), 0)

    use_buffered = is_dual_core and tiles_per_split >= 3
    bs_kwargs = {"pipeline_mode": pl.Buffered(3)} if use_buffered else {}

    kernel = functools.partial(
        _masked_mse_kernel,
        ignored_index=ignored_index,
        tile_rows=tile_rows,
        tiles_per_split=tiles_per_split,
        n_tiles=n_tiles,
        valid_rows=rows,
        mxu_row_reduce=is_dual_core,
    )

    # Scoped-VMEM budget: only raise the limit if the requested tiling needs it.
    buffers = 3 if use_buffered else 2
    vmem_need = buffers * tile_rows * LANES * (x2.dtype.itemsize +
                                               t2.dtype.itemsize)
    vmem_limit = None
    if vmem_need > 12 * _MiB:
        vmem_limit = int(min(vmem_need + 4 * _MiB, 64 * _MiB))

    bytes_accessed = (x2.size * x2.dtype.itemsize + t2.size * t2.dtype.itemsize
                      + 2 * num_splits * LANES * 4)

    out_sum, out_cnt = pl.pallas_call(
        kernel,
        out_shape=(
            jax.ShapeDtypeStruct((num_splits, 1, LANES), jnp.float32),
            jax.ShapeDtypeStruct((num_splits, 1, LANES), jnp.float32),
        ),
        grid_spec=pltpu.PrefetchScalarGridSpec(
            num_scalar_prefetch=0,
            grid=(num_splits, tiles_per_split),
            in_specs=[
                pl.BlockSpec((tile_rows, LANES), in_index, **bs_kwargs),
                pl.BlockSpec((tile_rows, LANES), in_index, **bs_kwargs),
            ],
            out_specs=(
                pl.BlockSpec((1, 1, LANES), lambda c, i: (c, 0, 0)),
                pl.BlockSpec((1, 1, LANES), lambda c, i: (c, 0, 0)),
            ),
        ),
        compiler_params=pltpu.CompilerParams(
            dimension_semantics=("parallel", "arbitrary"),
            vmem_limit_bytes=vmem_limit,
        ),
        cost_estimate=pl.CostEstimate(
            flops=6 * rows * LANES,
            bytes_accessed=bytes_accessed,
            transcendentals=0,
        ),
    )(x2, t2)

    # Final cross-lane / cross-split combine + the single divide in the wrapper.
    return jnp.sum(out_sum) / jnp.sum(out_cnt)


def _reference(inp, target, ignored_index):
    x = jnp.ravel(inp).astype(jnp.float32)
    t = jnp.ravel(target).astype(jnp.float32)
    valid = t != jnp.float32(ignored_index)
    diff = jnp.where(valid, x - t, 0.0)
    return jnp.sum(diff * diff) / jnp.sum(valid.astype(jnp.float32))


if __name__ == "__main__":
    ignored_index = -100
    keys = jax.random.split(jax.random.PRNGKey(0), 9)

    # --- test 1: module-shaped tiny input (ragged tail, single tile) --------
    # input (2, 4, 18) -> view(-1, 18) == (8, 18); target is (8, 18).
    inp = jax.random.normal(keys[0], (2, 4, 18), dtype=jnp.float32)
    target = jax.random.normal(keys[1], (8, 18), dtype=jnp.float32)
    target = jnp.where(jax.random.uniform(keys[2], (8, 18)) < 0.25,
                       jnp.float32(ignored_index), target)
    loss = custom_mse_loss(inp, target, ignored_index)
    jax.block_until_ready(loss)
    ref = _reference(inp, target, ignored_index)
    assert jnp.allclose(loss, ref, rtol=1e-5, atol=1e-6), (loss, ref)

    # --- test 2: multi-tile accumulation + forced 2-way split (dead-tile path)
    inp2 = jax.random.normal(keys[3], (16, 9, 18), dtype=jnp.float32)
    target2 = jax.random.normal(keys[4], (144, 18), dtype=jnp.float32)
    target2 = jnp.where(jax.random.uniform(keys[5], (144, 18)) < 0.25,
                        jnp.float32(ignored_index), target2)
    loss2 = custom_mse_loss(inp2, target2, ignored_index,
                            tile_rows=8, num_splits=2)
    jax.block_until_ready(loss2)
    ref2 = _reference(inp2, target2, ignored_index)
    assert jnp.allclose(loss2, ref2, rtol=1e-5, atol=1e-6), (loss2, ref2)

    # --- test 3: total % 128 == 0 -> zero-copy (no-pad) streaming path -------
    inp3 = jax.random.normal(keys[6], (16, 8, 18), dtype=jnp.float32)
    target3 = jax.random.normal(keys[7], (128, 18), dtype=jnp.float32)
    target3 = jnp.where(jax.random.uniform(keys[8], (128, 18)) < 0.25,
                        jnp.float32(ignored_index), target3)
    loss3 = custom_mse_loss(inp3, target3, ignored_index, tile_rows=8)
    jax.block_until_ready(loss3)
    ref3 = _reference(inp3, target3, ignored_index)
    assert jnp.allclose(loss3, ref3, rtol=1e-5, atol=1e-6), (loss3, ref3)

    print("KERNEL_OK")
</pallas_src>

<mosaic_0001>
module attributes {stable_mosaic.version = 11 : i64} {
  func.func @_masked_mse_kernel(%arg0: i32, %arg1: i32, %arg2: memref<8x128xf32, #tpu.memory_space<vmem>>, %arg3: memref<8x128xf32, #tpu.memory_space<vmem>>, %arg4: memref<1x1x128xf32, #tpu.memory_space<vmem>>, %arg5: memref<1x1x128xf32, #tpu.memory_space<vmem>>) attributes {dimension_semantics = [#tpu.dimension_semantics<parallel>, #tpu.dimension_semantics<arbitrary>], iteration_bounds = array<i64: 1, 1>, scalar_prefetch = 0 : i64, scratch_operands = 0 : i64, tpu.core_type = #tpu.core_type<tc>, window_params = [{transform_indices = @transform_0, window_bounds = array<i64: 8, 128>}, {transform_indices = @transform_1, window_bounds = array<i64: 8, 128>}, {transform_indices = @transform_2, window_bounds = array<i64: 1, 1, 128>}, {transform_indices = @transform_3, window_bounds = array<i64: 1, 1, 128>}]} {
    %c0_i32 = arith.constant 0 : i32
    %0 = arith.cmpi eq, %arg1, %c0_i32 : i32
    %1 = arith.extui %0 : i1 to i32
    %c0_i32_0 = arith.constant 0 : i32
    %2 = arith.cmpi ne, %1, %c0_i32_0 : i32
    scf.if %2 {
      %cst = arith.constant 0.000000e+00 : f32
      %11 = vector.broadcast %cst : f32 to vector<1x1x128xf32>
      %c0 = arith.constant 0 : index
      %c0_5 = arith.constant 0 : index
      %c0_6 = arith.constant 0 : index
      %12 = vector.load %arg4[%c0, %c0_5, %c0_6] : memref<1x1x128xf32, #tpu.memory_space<vmem>>, vector<1x1x128xf32>
      tpu.vector_store %arg4[%c0, %c0_5, %c0_6], %11 {strides = array<i32>} : memref<1x1x128xf32, #tpu.memory_space<vmem>>, vector<1x1x128xf32>,
      %cst_7 = arith.constant 0.000000e+00 : f32
      %13 = vector.broadcast %cst_7 : f32 to vector<1x1x128xf32>
      %c0_8 = arith.constant 0 : index
      %c0_9 = arith.constant 0 : index
      %c0_10 = arith.constant 0 : index
      %14 = vector.load %arg5[%c0_8, %c0_9, %c0_10] : memref<1x1x128xf32, #tpu.memory_space<vmem>>, vector<1x1x128xf32>
      tpu.vector_store %arg5[%c0_8, %c0_9, %c0_10], %13 {strides = array<i32>} : memref<1x1x128xf32, #tpu.memory_space<vmem>>, vector<1x1x128xf32>,
    } else {
    }
    %c1_i32 = arith.constant 1 : i32
    %3 = arith.muli %arg0, %c1_i32 : i32
    %4 = arith.addi %3, %arg1 : i32
    %c0_i32_1 = arith.constant 0 : i32
    %5 = arith.cmpi slt, %4, %c0_i32_1 : i32
    %6 = arith.extui %5 : i1 to i32
    %c0_i32_2 = arith.constant 0 : i32
    %7 = arith.cmpi ne, %6, %c0_i32_2 : i32
    scf.if %7 {
      %c0 = arith.constant 0 : index
      %c0_5 = arith.constant 0 : index
      %11 = vector.load %arg2[%c0, %c0_5] : memref<8x128xf32, #tpu.memory_space<vmem>>, vector<8x128xf32>
      %c0_6 = arith.constant 0 : index
      %c0_7 = arith.constant 0 : index
      %12 = vector.load %arg3[%c0_6, %c0_7] : memref<8x128xf32, #tpu.memory_space<vmem>>, vector<8x128xf32>
      %cst = arith.constant -1.000000e+02 : f32
      %13 = vector.broadcast %cst : f32 to vector<8x128xf32>
      %14 = arith.cmpf one, %12, %13 : vector<8x128xf32>
      %15 = arith.subf %11, %12 : vector<8x128xf32>
      %cst_8 = arith.constant 0.000000e+00 : f32
      %16 = vector.broadcast %cst_8 : f32 to vector<8x128xf32>
      %17 = arith.select %14, %15, %16 : vector<8x128xi1>, vector<8x128xf32>
      %18 = arith.mulf %17, %17 : vector<8x128xf32>
      %19 = arith.extui %14 : vector<8x128xi1> to vector<8x128xi32>
      %20 = arith.sitofp %19 : vector<8x128xi32> to vector<8x128xf32>
      %cst_9 = arith.constant dense<0.000000e+00> : vector<128xf32>
      %21 = vector.multi_reduction <add>, %18, %cst_9 [0] : vector<8x128xf32> to vector<128xf32>
      %22 = vector.shape_cast %21 : vector<128xf32> to vector<1x128xf32>
      %cst_10 = arith.constant dense<0.000000e+00> : vector<128xf32>
      %23 = vector.multi_reduction <add>, %20, %cst_10 [0] : vector<8x128xf32> to vector<128xf32>
      %24 = vector.shape_cast %23 : vector<128xf32> to vector<1x128xf32>
      %c0_11 = arith.constant 0 : index
      %c0_12 = arith.constant 0 : index
      %c0_13 = arith.constant 0 : index
      %25 = vector.load %arg4[%c0_11, %c0_12, %c0_13] : memref<1x1x128xf32, #tpu.memory_space<vmem>>, vector<1x1x128xf32>
      %26 = vector.shape_cast %22 : vector<1x128xf32> to vector<1x1x128xf32>
      %27 = arith.addf %25, %26 : vector<1x1x128xf32>
      %c0_14 = arith.constant 0 : index
      %c0_15 = arith.constant 0 : index
      %c0_16 = arith.constant 0 : index
      %28 = vector.load %arg4[%c0_14, %c0_15, %c0_16] : memref<1x1x128xf32, #tpu.memory_space<vmem>>, vector<1x1x128xf32>
      tpu.vector_store %arg4[%c0_14, %c0_15, %c0_16], %27 {strides = array<i32>} : memref<1x1x128xf32, #tpu.memory_space<vmem>>, vector<1x1x128xf32>,
      %c0_17 = arith.constant 0 : index
      %c0_18 = arith.constant 0 : index
      %c0_19 = arith.constant 0 : index
      %29 = vector.load %arg5[%c0_17, %c0_18, %c0_19] : memref<1x1x128xf32, #tpu.memory_space<vmem>>, vector<1x1x128xf32>
      %30 = vector.shape_cast %24 : vector<1x128xf32> to vector<1x1x128xf32>
      %31 = arith.addf %29, %30 : vector<1x1x128xf32>
      %c0_20 = arith.constant 0 : index
      %c0_21 = arith.constant 0 : index
      %c0_22 = arith.constant 0 : index
      %32 = vector.load %arg5[%c0_20, %c0_21, %c0_22] : memref<1x1x128xf32, #tpu.memory_space<vmem>>, vector<1x1x128xf32>
      tpu.vector_store %arg5[%c0_20, %c0_21, %c0_22], %31 {strides = array<i32>} : memref<1x1x128xf32, #tpu.memory_space<vmem>>, vector<1x1x128xf32>,
    } else {
    }
    %c0_i32_3 = arith.constant 0 : i32
    %8 = arith.cmpi sge, %4, %c0_i32_3 : i32
    %9 = arith.extui %8 : i1 to i32
    %c0_i32_4 = arith.constant 0 : i32
    %10 = arith.cmpi ne, %9, %c0_i32_4 : i32
    scf.if %10 {
      %c0 = arith.constant 0 : index
      %c0_5 = arith.constant 0 : index
      %11 = vector.load %arg2[%c0, %c0_5] : memref<8x128xf32, #tpu.memory_space<vmem>>, vector<8x128xf32>
      %c0_6 = arith.constant 0 : index
      %c0_7 = arith.constant 0 : index
      %12 = vector.load %arg3[%c0_6, %c0_7] : memref<8x128xf32, #tpu.memory_space<vmem>>, vector<8x128xf32>
      %cst = arith.constant -1.000000e+02 : f32
      %13 = vector.broadcast %cst : f32 to vector<8x128xf32>
      %14 = arith.cmpf one, %12, %13 : vector<8x128xf32>
      %c8_i32 = arith.constant 8 : i32
      %15 = arith.muli %4, %c8_i32 : i32
      %16 = tpu.iota {dimensions = array<i32: 0>} : vector<8x128xi32>
      %17 = vector.broadcast %15 : i32 to vector<8x128xi32>
      %18 = arith.addi %17, %16 : vector<8x128xi32>
      %c2_i32 = arith.constant 2 : i32
      %19 = vector.broadcast %c2_i32 : i32 to vector<8x128xi32>
      %20 = arith.cmpi slt, %18, %19 : vector<8x128xi32>
      %21 = arith.andi %14, %20 : vector<8x128xi1>
      %22 = arith.subf %11, %12 : vector<8x128xf32>
      %cst_8 = arith.constant 0.000000e+00 : f32
      %23 = vector.broadcast %cst_8 : f32 to vector<8x128xf32>
      %24 = arith.select %21, %22, %23 : vector<8x128xi1>, vector<8x128xf32>
      %25 = arith.mulf %24, %24 : vector<8x128xf32>
      %26 = arith.extui %21 : vector<8x128xi1> to vector<8x128xi32>
      %27 = arith.sitofp %26 : vector<8x128xi32> to vector<8x128xf32>
      %cst_9 = arith.constant dense<0.000000e+00> : vector<128xf32>
      %28 = vector.multi_reduction <add>, %25, %cst_9 [0] : vector<8x128xf32> to vector<128xf32>
      %29 = vector.shape_cast %28 : vector<128xf32> to vector<1x128xf32>
      %cst_10 = arith.constant dense<0.000000e+00> : vector<128xf32>
      %30 = vector.multi_reduction <add>, %27, %cst_10 [0] : vector<8x128xf32> to vector<128xf32>
      %31 = vector.shape_cast %30 : vector<128xf32> to vector<1x128xf32>
      %c0_11 = arith.constant 0 : index
      %c0_12 = arith.constant 0 : index
      %c0_13 = arith.constant 0 : index
      %32 = vector.load %arg4[%c0_11, %c0_12, %c0_13] : memref<1x1x128xf32, #tpu.memory_space<vmem>>, vector<1x1x128xf32>
      %33 = vector.shape_cast %29 : vector<1x128xf32> to vector<1x1x128xf32>
      %34 = arith.addf %32, %33 : vector<1x1x128xf32>
      %c0_14 = arith.constant 0 : index
      %c0_15 = arith.constant 0 : index
      %c0_16 = arith.constant 0 : index
      %35 = vector.load %arg4[%c0_14, %c0_15, %c0_16] : memref<1x1x128xf32, #tpu.memory_space<vmem>>, vector<1x1x128xf32>
      tpu.vector_store %arg4[%c0_14, %c0_15, %c0_16], %34 {strides = array<i32>} : memref<1x1x128xf32, #tpu.memory_space<vmem>>, vector<1x1x128xf32>,
      %c0_17 = arith.constant 0 : index
      %c0_18 = arith.constant 0 : index
      %c0_19 = arith.constant 0 : index
      %36 = vector.load %arg5[%c0_17, %c0_18, %c0_19] : memref<1x1x128xf32, #tpu.memory_space<vmem>>, vector<1x1x128xf32>
      %37 = vector.shape_cast %31 : vector<1x128xf32> to vector<1x1x128xf32>
      %38 = arith.addf %36, %37 : vector<1x1x128xf32>
      %c0_20 = arith.constant 0 : index
      %c0_21 = arith.constant 0 : index
      %c0_22 = arith.constant 0 : index
      %39 = vector.load %arg5[%c0_20, %c0_21, %c0_22] : memref<1x1x128xf32, #tpu.memory_space<vmem>>, vector<1x1x128xf32>
      tpu.vector_store %arg5[%c0_20, %c0_21, %c0_22], %38 {strides = array<i32>} : memref<1x1x128xf32, #tpu.memory_space<vmem>>, vector<1x1x128xf32>,
    } else {
    }
    return
  }
  func.func @transform_0(%arg0: i32, %arg1: i32) -> (i32, i32) {
    %c1_i32 = arith.constant 1 : i32
    %0 = arith.muli %arg0, %c1_i32 : i32
    %1 = arith.addi %0, %arg1 : i32
    %c0_i32 = arith.constant 0 : i32
    %2 = arith.minsi %1, %c0_i32 : i32
    %c0_i32_0 = arith.constant 0 : i32
    %c0_i32_1 = arith.constant 0 : i32
    return %2, %c0_i32_0 : i32, i32
  }
  func.func @transform_1(%arg0: i32, %arg1: i32) -> (i32, i32) {
    %c1_i32 = arith.constant 1 : i32
    %0 = arith.muli %arg0, %c1_i32 : i32
    %1 = arith.addi %0, %arg1 : i32
    %c0_i32 = arith.constant 0 : i32
    %2 = arith.minsi %1, %c0_i32 : i32
    %c0_i32_0 = arith.constant 0 : i32
    %c0_i32_1 = arith.constant 0 : i32
    return %2, %c0_i32_0 : i32, i32
  }
  func.func @transform_2(%arg0: i32, %arg1: i32) -> (i32, i32, i32) {
    %c0_i32 = arith.constant 0 : i32
    %c0_i32_0 = arith.constant 0 : i32
    %c0_i32_1 = arith.constant 0 : i32
    return %arg0, %c0_i32, %c0_i32_0 : i32, i32, i32
  }
  func.func @transform_3(%arg0: i32, %arg1: i32) -> (i32, i32, i32) {
    %c0_i32 = arith.constant 0 : i32
    %c0_i32_0 = arith.constant 0 : i32
    %c0_i32_1 = arith.constant 0 : i32
    return %arg0, %c0_i32, %c0_i32_0 : i32, i32, i32
  }
}

</mosaic_0001>

<llo_original>
// kernel: tpu_custom_call.1
$region0: #{tpu_custom_call.1}
  #allocation0 [shape = 'u32[]', space=smem, size = 0x4, offset = 0x4, fixed_abs, tag = 'smem constant byte address 0x4 - core index']
  #allocation1 [shape = 'u32[144,128]{1,0:T(1,128)}', space=vmem, size = 0x12000, scoped, tag = 'internal scratch']
  %s0 = inlined_call_operand.hbm [shape: f32[2,128], index: 0, kind: input, shape index: {}]
  %s1 = inlined_call_operand.hbm [shape: f32[2,128], index: 1, kind: input, shape index: {}]
  %s2 = inlined_call_operand.hbm [shape: f32[1,1,128], index: 2, kind: output, shape index: {0}]
  %s3 = inlined_call_operand.hbm [shape: f32[1,1,128], index: 3, kind: output, shape index: {1}]
  %4 = xla_tuple %s2, %s3
  %s5 = sld [smem:[#allocation0]]
  $region46: #{tpu_custom_call.1} parent=0
    _
  %s7 = ssub.s32 1, %s5
  %s8 = scalar_select 0, %s7, %s5
  $region1: #{tpu_custom_call.1} parent=0
    #allocation2 [shape = 'u8[4096]{0}', space=vmem, size = 0x1000, scoped, tag = 'input window, operand 0, single buffered']
    #allocation3 [shape = 's32[1]{0}', space=sflag, size = 0x4, scoped, tag = 'scoped memory for tpu_custom_call.1']
    #allocation4 [shape = 's32[1]{0}', space=sflag, size = 0x4, scoped, tag = 'scoped memory for tpu_custom_call.1']
    #allocation5 [shape = 'u8[4096]{0}', space=vmem, size = 0x1000, scoped, tag = 'input window, operand 1, single buffered']
    #allocation6 [shape = 's32[1]{0}', space=sflag, size = 0x4, scoped, tag = 'scoped memory for tpu_custom_call.1']
    #allocation7 [shape = 'u8[512]{0}', space=vmem, size = 0x400, scoped, tag = 'output window, operand 0, single buffered']
    #allocation8 [shape = 'u8[512]{0}', space=vmem, size = 0x400, scoped, tag = 'output window, operand 1, single buffered']
    #allocation9 [shape = 's32[1]{0}', space=sflag, size = 0x4, scoped, tag = 'scoped memory for tpu_custom_call.1']
    %9 = vsyncpa [#allocation3], 0
    %10 = vsyncpa [#allocation6], 0
    %11 = vsyncpa [#allocation4], 0
    %12 = vsyncpa [#allocation9], 0
    // Predicated region
    $region2: #{tpu_custom_call.1} parent=1 // pred_check
      _
    $region3: #{tpu_custom_call.1} parent=1 // pred_check_branch
      %14 = sbr.rel (0) target = $region5
    $region4: #{tpu_custom_call.1} parent=1 // pred_region
      %s15 = sadd.s32 0, 0
      %p16 = scmp.lt.s32.totalorder %s15, 0
      %s17 = scalar_select %p16, %s15, 0
      %s18 = smul.u32 4, %s17
      %s19 = ssub.s32 1, %s18
      %s20 = smul.u32 32, %s19
      %s22 = ssub.s32 128, %s20
      %23 = vsyncadd [#allocation3], %s22
      %p24 = scmp.ne.s32.totalorder 0, %s20
      %s25 = smul.addr %s18, 32
      %s26 = scalar_lea.hbm %s0, %s25
      %s27 = smul.u32 2, %s19
      %s28 = sshll.u32 [#allocation2], 4
      %s29 = int_to_ptr.vmem [resolvable:$true] %s28
      %s30 = sshll.u32 %s27, 4
      %34 = dma.hbm_to_vmem [thread:$0]  (%p24), %s26, %s30, %s29, [#allocation3], 32, 32, 2
    $region5: #{tpu_custom_call.1} parent=1 // pred_fallthru
      _
    // Predicated region
    $region6: #{tpu_custom_call.1} parent=1 // pred_check
      _
    $region7: #{tpu_custom_call.1} parent=1 // pred_check_branch
      %36 = sbr.rel (0) target = $region9
    $region8: #{tpu_custom_call.1} parent=1 // pred_region
      %s37 = sadd.s32 0, 0
      %p38 = scmp.lt.s32.totalorder %s37, 0
      %s39 = scalar_select %p38, %s37, 0
      %s40 = smul.u32 4, %s39
      %s41 = ssub.s32 1, %s40
      %s42 = smul.u32 32, %s41
      %s44 = ssub.s32 128, %s42
      %45 = vsyncadd [#allocation6], %s44
      %p46 = scmp.ne.s32.totalorder 0, %s42
      %s47 = smul.addr %s40, 32
      %s48 = scalar_lea.hbm %s1, %s47
      %s49 = smul.u32 2, %s41
      %s50 = sshll.u32 [#allocation5], 4
      %s51 = int_to_ptr.vmem [resolvable:$true] %s50
      %s52 = sshll.u32 %s49, 4
      %56 = dma.hbm_to_vmem [thread:$0]  (%p46), %s48, %s52, %s51, [#allocation6], 32, 32, 2
    $region9: #{tpu_custom_call.1} parent=1 // pred_fallthru
      _
    // Predicated region
    $region10: #{tpu_custom_call.1} parent=1 // pred_check
      _
    $region11: #{tpu_custom_call.1} parent=1 // pred_check_branch
      %58 = sbr.rel (0) target = $region13
    $region12: #{tpu_custom_call.1} parent=1 // pred_region
      %59 = dma.done [#allocation3], 128
    $region13: #{tpu_custom_call.1} parent=1 // pred_fallthru
      _
    // Predicated region
    $region14: #{tpu_custom_call.1} parent=1 // pred_check
      _
    $region15: #{tpu_custom_call.1} parent=1 // pred_check_branch
      %61 = sbr.rel (0) target = $region17
    $region16: #{tpu_custom_call.1} parent=1 // pred_region
      %62 = dma.done [#allocation6], 128
    $region17: #{tpu_custom_call.1} parent=1 // pred_fallthru
      _
    %s63 = sadd.s32 0, 0
    %p64 = scmp.lt.s32.totalorder %s63, 0
    %s65 = scalar_select %p64, %s63, 0
    %s66 = smul.u32 4, %s65
    %s67 = ssub.s32 1, %s66
    %s68 = smul.u32 32, %s67
    %s69 = sadd.s32 0, 0
    %p70 = scmp.lt.s32.totalorder %s69, 0
    %s71 = scalar_select %p70, %s69, 0
    %s72 = smul.u32 4, %s71
    %s73 = ssub.s32 1, %s72
    %s74 = smul.u32 32, %s73
    %p75 = scmp.eq.s32.totalorder 0, 0
    // Predicated region
    $region18: #{tpu_custom_call.1} parent=1 // pred_check
      %p76 = pneg %p75
    $region19: #{tpu_custom_call.1} parent=1 // pred_check_branch
      %78 = sbr.rel (%p76) target = $region21
    $region20: #{tpu_custom_call.1} parent=1 // pred_region
      %79 = vst [vmem:[#allocation7] sm:$0x1] 0.0
      %80 = vst [vmem:[#allocation8] sm:$0x1] 0.0
    $region21: #{tpu_custom_call.1} parent=1 // pred_fallthru
      _
    %s81 = sadd.s32 0, 0
    %p82 = scmp.lt.s32.totalorder %s81, 0
    // Predicated region
    $region22: #{tpu_custom_call.1} parent=1 // pred_check
      %p83 = pneg %p82
    $region23: #{tpu_custom_call.1} parent=1 // pred_check_branch
      %85 = sbr.rel (%p83) target = $region25
    $region24: #{tpu_custom_call.1} parent=1 // pred_region
      %v86 = vld [vmem:[#allocation2] sm:$0xff]
      %v87 = vld [vmem:[#allocation5] sm:$0xff]
      %vm88 = vcmp.ne.f32.partialorder %v87, -100.0
      %v89 = vsub.f32 %v86, %v87
      %v90 = vsel %vm88, %v89, 0.0
      %v91 = vmul.f32 %v90, %v90
      %v92 = vsel %vm88, 1, 0
      %v93 = vcvt.s32.f32 %v92
      %v94 = vrot.slane %v91, 4
      %v95 = vadd.f32 %v91, %v94
      %v96 = vrot.slane %v95, 2
      %v97 = vadd.f32 %v95, %v96
      %v98 = vrot.slane %v97, 1
      %v99 = vadd.f32 %v97, %v98
      %v100 = vrot.slane %v93, 4
      %v101 = vadd.f32 %v93, %v100
      %v102 = vrot.slane %v101, 2
      %v103 = vadd.f32 %v101, %v102
      %v104 = vrot.slane %v103, 1
      %v105 = vadd.f32 %v103, %v104
      %v106 = vld [vmem:[#allocation7] sm:$0x1]
      %v107 = vadd.f32 %v106, %v99
      %108 = vst [vmem:[#allocation7] sm:$0x1] %v107
      %v109 = vld [vmem:[#allocation8] sm:$0x1]
      %v110 = vadd.f32 %v109, %v105
      %111 = vst [vmem:[#allocation8] sm:$0x1] %v110
    $region25: #{tpu_custom_call.1} parent=1 // pred_fallthru
      _
    %p112 = scmp.ge.s32.totalorder %s81, 0
    // Predicated region
    $region26: #{tpu_custom_call.1} parent=1 // pred_check
      %p113 = pneg %p112
    $region27: #{tpu_custom_call.1} parent=1 // pred_check_branch
      %115 = sbr.rel (%p113) target = $region29
    $region28: #{tpu_custom_call.1} parent=1 // pred_region
      %v116 = vld [vmem:[#allocation2] sm:$0xff]
      %v117 = vld [vmem:[#allocation5] sm:$0xff]
      %vm118 = vcmp.ne.f32.partialorder %v117, -100.0
      %s119 = smul.u32 %s81, 8
      %v120 = vlaneseq
      %v121 = vshrl.u32 %v120, 7
      %v122 = vstv %s119
      %v123 = vadd.s32 %v122, %v121
      %vm124 = vcmp.lt.s32.totalorder %v123, 2
      %vm125 = vmand %vm118, %vm124
      %v126 = vsub.f32 %v116, %v117
      %v127 = vsel %vm125, %v126, 0.0
      %v128 = vmul.f32 %v127, %v127
      %v129 = vsel %vm125, 1, 0
      %v130 = vcvt.s32.f32 %v129
      %v131 = vrot.slane %v128, 4
      %v132 = vadd.f32 %v128, %v131
      %v133 = vrot.slane %v132, 2
      %v134 = vadd.f32 %v132, %v133
      %v135 = vrot.slane %v134, 1
      %v136 = vadd.f32 %v134, %v135
      %v137 = vrot.slane %v130, 4
      %v138 = vadd.f32 %v130, %v137
      %v139 = vrot.slane %v138, 2
      %v140 = vadd.f32 %v138, %v139
      %v141 = vrot.slane %v140, 1
      %v142 = vadd.f32 %v140, %v141
      %v143 = vld [vmem:[#allocation7] sm:$0x1]
      %v144 = vadd.f32 %v143, %v136
      %145 = vst [vmem:[#allocation7] sm:$0x1] %v144
      %v146 = vld [vmem:[#allocation8] sm:$0x1]
      %v147 = vadd.f32 %v146, %v142
      %148 = vst [vmem:[#allocation8] sm:$0x1] %v147
    $region29: #{tpu_custom_call.1} parent=1 // pred_fallthru
      _
    // Predicated region
    $region30: #{tpu_custom_call.1} parent=1 // pred_check
      _
    $region31: #{tpu_custom_call.1} parent=1 // pred_check_branch
      %150 = sbr.rel (0) target = $region33
    $region32: #{tpu_custom_call.1} parent=1 // pred_region
      %s152 = ssub.s32 16, 16
      %153 = vsyncadd [#allocation4], %s152
      %s155 = sshll.u32 [#allocation7], 4
      %s156 = int_to_ptr.vmem [resolvable:$true] %s155
      %158 = dma.vmem_to_hbm [thread:$0]  %s156, 16, %s2, [#allocation4]
    $region33: #{tpu_custom_call.1} parent=1 // pred_fallthru
      _
    // Predicated region
    $region34: #{tpu_custom_call.1} parent=1 // pred_check
      _
    $region35: #{tpu_custom_call.1} parent=1 // pred_check_branch
      %160 = sbr.rel (0) target = $region37
    $region36: #{tpu_custom_call.1} parent=1 // pred_region
      %s162 = ssub.s32 16, 16
      %163 = vsyncadd [#allocation9], %s162
      %s165 = sshll.u32 [#allocation8], 4
      %s166 = int_to_ptr.vmem [resolvable:$true] %s165
      %168 = dma.vmem_to_hbm [thread:$0]  %s166, 16, %s3, [#allocation9]
    $region37: #{tpu_custom_call.1} parent=1 // pred_fallthru
      _
    // Predicated region
    $region38: #{tpu_custom_call.1} parent=1 // pred_check
      _
    $region39: #{tpu_custom_call.1} parent=1 // pred_check_branch
      %170 = sbr.rel (0) target = $region41
    $region40: #{tpu_custom_call.1} parent=1 // pred_region
      %171 = dma.done [#allocation4], 16
    $region41: #{tpu_custom_call.1} parent=1 // pred_fallthru
      _
    // Predicated region
    $region42: #{tpu_custom_call.1} parent=1 // pred_check
      _
    $region43: #{tpu_custom_call.1} parent=1 // pred_check_branch
      %173 = sbr.rel (0) target = $region45
    $region44: #{tpu_custom_call.1} parent=1 // pred_region
      %174 = dma.done [#allocation9], 16
    $region45: #{tpu_custom_call.1} parent=1 // pred_fallthru
      _
    %175 = vsyncpa [#allocation3], 1
    %176 = vsyncpa [#allocation6], 1
    %177 = vsyncpa [#allocation4], 1
    %178 = vsyncpa [#allocation9], 1

</llo_original>
